<compile_context>
chip_gen: v7x
topology: tpu7x:2x2x1
jax: 0.10.0
libtpu: 0.0.40
codegen_flags: <defaults>
</compile_context>

<pallas_src>
import functools

import jax
import jax.numpy as jnp
from jax import lax
from jax.experimental import pallas as pl
from jax.experimental.pallas import tpu as pltpu

_LANE = 128


def _round_up(x, m):
    return (x + m - 1) // m * m


# ----------------------------------------------------------------------------
# Pallas kernel: (patches @ W_scaled) + bias [+ residual] -> activation
# ----------------------------------------------------------------------------
def _make_conv_bias_act_kernel(activation: str, has_residual: bool):
    def kernel(p_ref, w_ref, b_ref, *rest):
        if has_residual:
            r_ref, o_ref = rest
        else:
            (o_ref,) = rest
        acc = jnp.dot(p_ref[...], w_ref[...], preferred_element_type=jnp.float32)
        acc = acc + b_ref[...]                       # folded-BN bias
        if has_residual:
            acc = acc + r_ref[...]
        if activation == "relu":
            acc = jnp.maximum(acc, 0.0)
        elif activation == "gelu":
            # tanh-approx GELU per perf feedback (exact erf is costlier on EUP).
            acc = jax.nn.gelu(acc, approximate=True)
        elif activation == "elu":
            acc = jnp.where(acc > 0, acc, jnp.expm1(acc))
        else:
            raise ValueError("Invalid activation function")
        o_ref[...] = acc.astype(o_ref.dtype)

    return kernel


def conv_bn_act(patches, w2d, bias, residual=None, activation="relu",
                tile_m=512, out_dtype=jnp.float32):
    """patches: [M, Kp] bf16; w2d: [Kp, Cp] bf16 (BN scale folded);
    bias: [1, Cp] f32; residual: [M, Cp] f32 or None.  Kp, Cp % 128 == 0."""
    M, Kp = patches.shape
    Cp = w2d.shape[1]
    assert Kp % _LANE == 0 and Cp % _LANE == 0

    tile_m = min(tile_m, _round_up(M, 8))            # keep sublane alignment
    grid = (pl.cdiv(M, tile_m),)

    has_res = residual is not None
    inputs = [patches, w2d, bias]
    in_specs = [
        pl.BlockSpec((tile_m, Kp), lambda i: (i, 0)),
        pl.BlockSpec((Kp, Cp), lambda i: (0, 0)),
        pl.BlockSpec((1, Cp), lambda i: (0, 0)),
    ]
    if has_res:
        inputs.append(residual)
        in_specs.append(pl.BlockSpec((tile_m, Cp), lambda i: (i, 0)))

    out_itemsize = jnp.dtype(out_dtype).itemsize
    cost = pl.CostEstimate(
        flops=2 * M * Kp * Cp,
        transcendentals=0 if activation == "relu" else M * Cp,
        bytes_accessed=(patches.size * patches.dtype.itemsize
                        + w2d.size * w2d.dtype.itemsize
                        + bias.size * 4
                        + (M * Cp * 4 if has_res else 0)
                        + M * Cp * out_itemsize),
    )

    kernel = _make_conv_bias_act_kernel(activation, has_res)
    return pl.pallas_call(
        kernel,
        out_shape=jax.ShapeDtypeStruct((M, Cp), out_dtype),
        grid_spec=pltpu.PrefetchScalarGridSpec(
            num_scalar_prefetch=0,
            grid=grid,
            in_specs=in_specs,
            out_specs=pl.BlockSpec((tile_m, Cp), lambda i: (i, 0)),
        ),
        compiler_params=pltpu.CompilerParams(
            dimension_semantics=("parallel",)),
        cost_estimate=cost,
    )(*inputs)


# ----------------------------------------------------------------------------
# Glue: NHWC im2col, BN folding, option-A shortcut, full BasicBlock forward
# ----------------------------------------------------------------------------
def _im2col_nhwc(x, stride):
    """x: [N, H, W, C].  Returns patches [N*Ho*Wo, 9*C], inner order (kh, kw, c)."""
    N, H, W, C = x.shape
    xp = jnp.pad(x, ((0, 0), (1, 1), (1, 1), (0, 0)))
    Ho = (H + 2 - 3) // stride + 1
    Wo = (W + 2 - 3) // stride + 1
    cols = []
    for kh in range(3):
        for kw in range(3):
            cols.append(xp[:, kh:kh + (Ho - 1) * stride + 1:stride,
                            kw:kw + (Wo - 1) * stride + 1:stride, :])
    patches = jnp.concatenate(cols, axis=-1)         # [N, Ho, Wo, 9*C]
    return patches.reshape(N * Ho * Wo, 9 * C), Ho, Wo


def _prep_weight_bias(w_oihw, bn, eps=1e-5):
    """Fold BN scale into the weights, pad K/Cout to lane multiples, cast bf16."""
    Cout, Cin = w_oihw.shape[0], w_oihw.shape[1]
    scale = bn["gamma"] / jnp.sqrt(bn["running_var"] + eps)
    bias = bn["beta"] - bn["running_mean"] * scale
    # [Cout, Cin, kh, kw] -> [kh, kw, Cin, Cout] -> [9*Cin, Cout]  (matches im2col)
    w2d = w_oihw.transpose(2, 3, 1, 0).reshape(9 * Cin, Cout)
    w2d = w2d * scale[None, :]                       # fold BN scale into weights
    K = 9 * Cin
    Kp = _round_up(K, _LANE)
    Cp = _round_up(Cout, _LANE)
    w2d = jnp.pad(w2d, ((0, Kp - K), (0, Cp - Cout))).astype(jnp.bfloat16)
    bias = jnp.pad(bias, (0, Cp - Cout)).reshape(1, Cp).astype(jnp.float32)
    return w2d, bias, Kp, Cp


def basic_block_forward(x, params, *, in_planes, planes, stride=1,
                        option="A", activation="relu"):
    """x: [N, in_planes, H, W] (NCHW) -> [N, planes, Ho, Wo]."""
    N, C, H, W = x.shape
    assert C == in_planes
    x_nhwc = x.transpose(0, 2, 3, 1)                 # stay NHWC inside the block

    # ---- conv1 + bn1 + activation ----
    w1, b1, Kp1, Cp = _prep_weight_bias(params["w1"], params["bn1"])
    patches1, Ho, Wo = _im2col_nhwc(x_nhwc, stride)
    K1 = patches1.shape[1]
    patches1 = jnp.pad(patches1, ((0, 0), (0, Kp1 - K1))).astype(jnp.bfloat16)
    out1 = conv_bn_act(patches1, w1, b1, None, activation,
                       out_dtype=jnp.bfloat16)       # [M1, Cp] bf16
    out1_nhwc = out1.reshape(N, Ho, Wo, Cp)[..., :planes]

    # ---- shortcut (lane-padded to Cp) ----
    if stride != 1 or in_planes != planes:
        if option == "A":
            s = x_nhwc[:, ::2, ::2, :]
            p = planes // 4
            sc = jnp.pad(s, ((0, 0), (0, 0), (0, 0), (p, Cp - in_planes - p)))
        else:
            # TODO(synk): option 'B' (1x1 conv + BN downsample) not implemented.
            raise NotImplementedError("option B not built in this example")
    else:
        sc = jnp.pad(x_nhwc, ((0, 0), (0, 0), (0, 0), (0, Cp - in_planes)))
    sc_flat = sc.reshape(-1, Cp).astype(jnp.float32)

    # ---- conv2 + bn2 + residual + activation (fully fused) ----
    w2, b2, Kp2, Cp2 = _prep_weight_bias(params["w2"], params["bn2"])
    assert Cp2 == Cp
    patches2, Ho2, Wo2 = _im2col_nhwc(out1_nhwc, 1)
    K2 = patches2.shape[1]
    patches2 = jnp.pad(patches2, ((0, 0), (0, Kp2 - K2))).astype(jnp.bfloat16)
    out2 = conv_bn_act(patches2, w2, b2, sc_flat, activation,
                       out_dtype=jnp.float32)        # [M2, Cp] f32
    out2 = out2.reshape(N, Ho2, Wo2, Cp)[..., :planes]
    return out2.transpose(0, 3, 1, 2)                # back to NCHW


# ----------------------------------------------------------------------------
# Pure-JAX f32 reference (numerical sanity check)
# ----------------------------------------------------------------------------
def _ref_forward(x, params, *, in_planes, planes, stride, activation):
    def conv(x, w, s):
        return lax.conv_general_dilated(
            x, w, (s, s), [(1, 1), (1, 1)],
            dimension_numbers=("NCHW", "OIHW", "NCHW"))

    def bn(y, p, eps=1e-5):
        sh = (1, -1, 1, 1)
        return (y - p["running_mean"].reshape(sh)) / jnp.sqrt(
            p["running_var"].reshape(sh) + eps) * p["gamma"].reshape(sh) \
            + p["beta"].reshape(sh)

    act = {"relu": lambda z: jnp.maximum(z, 0.0),
           "gelu": lambda z: jax.nn.gelu(z, approximate=True),
           "elu": lambda z: jnp.where(z > 0, z, jnp.expm1(z))}[activation]

    def shortcut_a(x):
        s = x[:, :, ::2, ::2]
        p = planes // 4
        return jnp.pad(s, ((0, 0), (p, p), (0, 0), (0, 0)))

    out = act(bn(conv(x, params["w1"], stride), params["bn1"]))
    out = bn(conv(out, params["w2"], 1), params["bn2"])
    if stride != 1 or in_planes != planes:
        out = out + shortcut_a(x)
    else:
        out = out + x
    return act(out)


# ----------------------------------------------------------------------------
def _init_params(key, in_planes, planes):
    k1, k2, k3, k4, k5, k6, k7, k8 = jax.random.split(key, 8)
    fan1 = in_planes * 9
    fan2 = planes * 9
    return {
        "w1": jax.random.normal(k1, (planes, in_planes, 3, 3), jnp.float32)
              * (2.0 / fan1) ** 0.5,
        "w2": jax.random.normal(k2, (planes, planes, 3, 3), jnp.float32)
              * (2.0 / fan2) ** 0.5,
        "bn1": {
            "gamma": jax.random.uniform(k3, (planes,), jnp.float32, 0.8, 1.2),
            "beta": 0.1 * jax.random.normal(k4, (planes,), jnp.float32),
            "running_mean": 0.1 * jax.random.normal(k5, (planes,), jnp.float32),
            "running_var": jax.random.uniform(k6, (planes,), jnp.float32, 0.5, 1.5),
        },
        "bn2": {
            "gamma": jax.random.uniform(k7, (planes,), jnp.float32, 0.8, 1.2),
            "beta": 0.1 * jax.random.normal(k8, (planes,), jnp.float32),
            "running_mean": jnp.zeros((planes,), jnp.float32),
            "running_var": jnp.ones((planes,), jnp.float32),
        },
    }


if __name__ == "__main__":
    in_planes, planes, stride = 4, 8, 2      # exercises the option-A shortcut
    activation = "relu"

    key = jax.random.PRNGKey(0)
    kx, kp = jax.random.split(key)
    x = jax.random.normal(kx, (2, in_planes, 16, 16), jnp.float32)  # NCHW
    params = _init_params(kp, in_planes, planes)

    fwd = jax.jit(functools.partial(
        basic_block_forward, in_planes=in_planes, planes=planes,
        stride=stride, option="A", activation=activation))
    out = jax.block_until_ready(fwd(x, params))

    ref = _ref_forward(x, params, in_planes=in_planes, planes=planes,
                       stride=stride, activation=activation)
    assert out.shape == (2, planes, 8, 8), out.shape
    # bf16 MXU operands -> loosened tolerance vs the pure-f32 reference.
    assert jnp.allclose(out, ref, rtol=5e-2, atol=5e-2), \
        float(jnp.max(jnp.abs(out - ref)))

    print("KERNEL_OK")
</pallas_src>

<mosaic_0001>
module attributes {stable_mosaic.version = 11 : i64} {
  func.func @kernel(%arg0: i32, %arg1: memref<128x128xbf16, #tpu.memory_space<vmem>>, %arg2: memref<128x128xbf16, #tpu.memory_space<vmem>>, %arg3: memref<1x128xf32, #tpu.memory_space<vmem>>, %arg4: memref<128x128xbf16, #tpu.memory_space<vmem>>) attributes {dimension_semantics = [#tpu.dimension_semantics<parallel>], iteration_bounds = array<i64: 1>, scalar_prefetch = 0 : i64, scratch_operands = 0 : i64, tpu.core_type = #tpu.core_type<tc>, window_params = [{transform_indices = @transform_0, window_bounds = array<i64: 128, 128>}, {pipeline_mode = #tpu.pipeline_mode<synchronous>, transform_indices = @transform_1, window_bounds = array<i64: 128, 128>}, {pipeline_mode = #tpu.pipeline_mode<synchronous>, transform_indices = @transform_2, window_bounds = array<i64: 1, 128>}, {transform_indices = @transform_3, window_bounds = array<i64: 128, 128>}]} {
    %c0 = arith.constant 0 : index
    %c0_0 = arith.constant 0 : index
    %0 = vector.load %arg1[%c0, %c0_0] : memref<128x128xbf16, #tpu.memory_space<vmem>>, vector<128x128xbf16>
    %c0_1 = arith.constant 0 : index
    %c0_2 = arith.constant 0 : index
    %1 = vector.load %arg2[%c0_1, %c0_2] : memref<128x128xbf16, #tpu.memory_space<vmem>>, vector<128x128xbf16>
    %cst = arith.constant dense<0.000000e+00> : vector<128x128xf32>
    %2 = tpu.matmul %0, %1, %cst {dimension_numbers = #tpu.dot_dimension_numbers<[1], [0], [0], [1], [0, 0, 1, 1], [], []>} : vector<128x128xbf16>, vector<128x128xbf16>, vector<128x128xf32> -> vector<128x128xf32>
    %c0_3 = arith.constant 0 : index
    %c0_4 = arith.constant 0 : index
    %3 = vector.load %arg3[%c0_3, %c0_4] : memref<1x128xf32, #tpu.memory_space<vmem>>, vector<1x128xf32>
    %4 = vector.broadcast %3 : vector<1x128xf32> to vector<128x128xf32>
    %5 = arith.addf %2, %4 : vector<128x128xf32>
    %cst_5 = arith.constant 0.000000e+00 : f32
    %6 = vector.broadcast %cst_5 : f32 to vector<128x128xf32>
    %7 = arith.maximumf %5, %6 : vector<128x128xf32>
    %8 = arith.truncf %7 : vector<128x128xf32> to vector<128x128xbf16>
    %c0_6 = arith.constant 0 : index
    %c0_7 = arith.constant 0 : index
    %9 = vector.load %arg4[%c0_6, %c0_7] : memref<128x128xbf16, #tpu.memory_space<vmem>>, vector<128x128xbf16>
    tpu.vector_store %arg4[%c0_6, %c0_7], %8 {strides = array<i32>} : memref<128x128xbf16, #tpu.memory_space<vmem>>, vector<128x128xbf16>,
    return
  }
  func.func @transform_0(%arg0: i32) -> (i32, i32) {
    %c0_i32 = arith.constant 0 : i32
    %c0_i32_0 = arith.constant 0 : i32
    return %arg0, %c0_i32 : i32, i32
  }
  func.func @transform_1(%arg0: i32) -> (i32, i32) {
    %c0_i32 = arith.constant 0 : i32
    %c0_i32_0 = arith.constant 0 : i32
    %c0_i32_1 = arith.constant 0 : i32
    return %c0_i32, %c0_i32_0 : i32, i32
  }
  func.func @transform_2(%arg0: i32) -> (i32, i32) {
    %c0_i32 = arith.constant 0 : i32
    %c0_i32_0 = arith.constant 0 : i32
    %c0_i32_1 = arith.constant 0 : i32
    return %c0_i32, %c0_i32_0 : i32, i32
  }
  func.func @transform_3(%arg0: i32) -> (i32, i32) {
    %c0_i32 = arith.constant 0 : i32
    %c0_i32_0 = arith.constant 0 : i32
    return %arg0, %c0_i32 : i32, i32
  }
}

module attributes {stable_mosaic.version = 11 : i64} {
  func.func @kernel(%arg0: i32, %arg1: memref<128x128xbf16, #tpu.memory_space<vmem>>, %arg2: memref<128x128xbf16, #tpu.memory_space<vmem>>, %arg3: memref<1x128xf32, #tpu.memory_space<vmem>>, %arg4: memref<128x128xf32, #tpu.memory_space<vmem>>, %arg5: memref<128x128xf32, #tpu.memory_space<vmem>>) attributes {dimension_semantics = [#tpu.dimension_semantics<parallel>], iteration_bounds = array<i64: 1>, scalar_prefetch = 0 : i64, scratch_operands = 0 : i64, tpu.core_type = #tpu.core_type<tc>, window_params = [{transform_indices = @transform_0, window_bounds = array<i64: 128, 128>}, {pipeline_mode = #tpu.pipeline_mode<synchronous>, transform_indices = @transform_1, window_bounds = array<i64: 128, 128>}, {pipeline_mode = #tpu.pipeline_mode<synchronous>, transform_indices = @transform_2, window_bounds = array<i64: 1, 128>}, {transform_indices = @transform_3, window_bounds = array<i64: 128, 128>}, {transform_indices = @transform_4, window_bounds = array<i64: 128, 128>}]} {
    %c0 = arith.constant 0 : index
    %c0_0 = arith.constant 0 : index
    %0 = vector.load %arg1[%c0, %c0_0] : memref<128x128xbf16, #tpu.memory_space<vmem>>, vector<128x128xbf16>
    %c0_1 = arith.constant 0 : index
    %c0_2 = arith.constant 0 : index
    %1 = vector.load %arg2[%c0_1, %c0_2] : memref<128x128xbf16, #tpu.memory_space<vmem>>, vector<128x128xbf16>
    %cst = arith.constant dense<0.000000e+00> : vector<128x128xf32>
    %2 = tpu.matmul %0, %1, %cst {dimension_numbers = #tpu.dot_dimension_numbers<[1], [0], [0], [1], [0, 0, 1, 1], [], []>} : vector<128x128xbf16>, vector<128x128xbf16>, vector<128x128xf32> -> vector<128x128xf32>
    %c0_3 = arith.constant 0 : index
    %c0_4 = arith.constant 0 : index
    %3 = vector.load %arg3[%c0_3, %c0_4] : memref<1x128xf32, #tpu.memory_space<vmem>>, vector<1x128xf32>
    %4 = vector.broadcast %3 : vector<1x128xf32> to vector<128x128xf32>
    %5 = arith.addf %2, %4 : vector<128x128xf32>
    %c0_5 = arith.constant 0 : index
    %c0_6 = arith.constant 0 : index
    %6 = vector.load %arg4[%c0_5, %c0_6] : memref<128x128xf32, #tpu.memory_space<vmem>>, vector<128x128xf32>
    %7 = arith.addf %5, %6 : vector<128x128xf32>
    %cst_7 = arith.constant 0.000000e+00 : f32
    %8 = vector.broadcast %cst_7 : f32 to vector<128x128xf32>
    %9 = arith.maximumf %7, %8 : vector<128x128xf32>
    %c0_8 = arith.constant 0 : index
    %c0_9 = arith.constant 0 : index
    %10 = vector.load %arg5[%c0_8, %c0_9] : memref<128x128xf32, #tpu.memory_space<vmem>>, vector<128x128xf32>
    tpu.vector_store %arg5[%c0_8, %c0_9], %9 {strides = array<i32>} : memref<128x128xf32, #tpu.memory_space<vmem>>, vector<128x128xf32>,
    return
  }
  func.func @transform_0(%arg0: i32) -> (i32, i32) {
    %c0_i32 = arith.constant 0 : i32
    %c0_i32_0 = arith.constant 0 : i32
    return %arg0, %c0_i32 : i32, i32
  }
  func.func @transform_1(%arg0: i32) -> (i32, i32) {
    %c0_i32 = arith.constant 0 : i32
    %c0_i32_0 = arith.constant 0 : i32
    %c0_i32_1 = arith.constant 0 : i32
    return %c0_i32, %c0_i32_0 : i32, i32
  }
  func.func @transform_2(%arg0: i32) -> (i32, i32) {
    %c0_i32 = arith.constant 0 : i32
    %c0_i32_0 = arith.constant 0 : i32
    %c0_i32_1 = arith.constant 0 : i32
    return %c0_i32, %c0_i32_0 : i32, i32
  }
  func.func @transform_3(%arg0: i32) -> (i32, i32) {
    %c0_i32 = arith.constant 0 : i32
    %c0_i32_0 = arith.constant 0 : i32
    return %arg0, %c0_i32 : i32, i32
  }
  func.func @transform_4(%arg0: i32) -> (i32, i32) {
    %c0_i32 = arith.constant 0 : i32
    %c0_i32_0 = arith.constant 0 : i32
    return %arg0, %c0_i32 : i32, i32
  }
}

</mosaic_0001>

<llo_original>
// kernel: basic_block_forward.2
$region0: #{basic_block_forward.2}
  #allocation0 [shape = 'u32[]', space=smem, size = 0x4, offset = 0x4, fixed_abs, tag = 'smem constant byte address 0x4 - core index']
  #allocation1 [shape = 'u32[144,128]{1,0:T(1,128)}', space=vmem, size = 0x12000, scoped, tag = 'internal scratch']
  %s0 = inlined_call_operand.vmem [shape: bf16[128,128], index: 0, kind: input, shape index: {}]
  %s1 = inlined_call_operand.vmem [shape: bf16[128,128], index: 1, kind: input, shape index: {}]
  %s2 = inlined_call_operand.vmem [shape: f32[1,128], index: 2, kind: input, shape index: {}]
  %s3 = inlined_call_operand.vmem [shape: bf16[128,128], index: 3, kind: output, shape index: {}]
  %s4 = sld [smem:[#allocation0]]
  $region22: #{basic_block_forward.2} parent=0
    _
  %s6 = ssub.s32 1, %s4
  %s7 = scalar_select 0, %s6, %s4
  // Predicated region
  $region2: #{basic_block_forward.2} parent=0 // pred_check
    _
  $region3: #{basic_block_forward.2} parent=0 // pred_check_branch
    %9 = sbr.rel (0) target = $region5
  $region4: #{basic_block_forward.2} parent=0 // pred_region
    _
  $region5: #{basic_block_forward.2} parent=0 // pred_fallthru
    _
  // Predicated region
  $region6: #{basic_block_forward.2} parent=0 // pred_check
    _
  $region7: #{basic_block_forward.2} parent=0 // pred_check_branch
    %11 = sbr.rel (0) target = $region9
  $region8: #{basic_block_forward.2} parent=0 // pred_region
    _
  $region9: #{basic_block_forward.2} parent=0 // pred_fallthru
    _
  // Predicated region
  $region10: #{basic_block_forward.2} parent=0 // pred_check
    _
  $region11: #{basic_block_forward.2} parent=0 // pred_check_branch
    %13 = sbr.rel (0) target = $region13
  $region12: #{basic_block_forward.2} parent=0 // pred_region
    _
  $region13: #{basic_block_forward.2} parent=0 // pred_fallthru
    _
  %v15 = vld [vmem:[%s0] sm:$0xf]
  %v16 = vld [vmem:[%s0 + $0x4] sm:$0xf]
  %v17 = vld [vmem:[%s0 + $0x8] sm:$0xf]
  %v18 = vld [vmem:[%s0 + $0xc] sm:$0xf]
  %v19 = vld [vmem:[%s0 + $0x10] sm:$0xf]
  %v20 = vld [vmem:[%s0 + $0x14] sm:$0xf]
  %v21 = vld [vmem:[%s0 + $0x18] sm:$0xf]
  %v22 = vld [vmem:[%s0 + $0x1c] sm:$0xf]
  %v23 = vld [vmem:[%s0 + $0x20] sm:$0xf]
  %v24 = vld [vmem:[%s0 + $0x24] sm:$0xf]
  %v25 = vld [vmem:[%s0 + $0x28] sm:$0xf]
  %v26 = vld [vmem:[%s0 + $0x2c] sm:$0xf]
  %v27 = vld [vmem:[%s0 + $0x30] sm:$0xf]
  %v28 = vld [vmem:[%s0 + $0x34] sm:$0xf]
  %v29 = vld [vmem:[%s0 + $0x38] sm:$0xf]
  %v30 = vld [vmem:[%s0 + $0x3c] sm:$0xf]
  %v31 = vld [vmem:[%s1] sm:$0xf]
  %v32 = vld [vmem:[%s1 + $0x4] sm:$0xf]
  %v33 = vld [vmem:[%s1 + $0x8] sm:$0xf]
  %v34 = vld [vmem:[%s1 + $0xc] sm:$0xf]
  %v35 = vld [vmem:[%s1 + $0x10] sm:$0xf]
  %v36 = vld [vmem:[%s1 + $0x14] sm:$0xf]
  %v37 = vld [vmem:[%s1 + $0x18] sm:$0xf]
  %v38 = vld [vmem:[%s1 + $0x1c] sm:$0xf]
  %v39 = vld [vmem:[%s1 + $0x20] sm:$0xf]
  %v40 = vld [vmem:[%s1 + $0x24] sm:$0xf]
  %v41 = vld [vmem:[%s1 + $0x28] sm:$0xf]
  %v42 = vld [vmem:[%s1 + $0x2c] sm:$0xf]
  %v43 = vld [vmem:[%s1 + $0x30] sm:$0xf]
  %v44 = vld [vmem:[%s1 + $0x34] sm:$0xf]
  %v45 = vld [vmem:[%s1 + $0x38] sm:$0xf]
  %v46 = vld [vmem:[%s1 + $0x3c] sm:$0xf]
  %v47 = vld [vmem:[%s2] sm:$0x1]
  %v49 = vlaneseq
  %v50 = vshrl.u32 %v49, 7
  %v51 = vsub.s32 0, %v50
  %v52 = vrot.slane %v47, %v51
  %v70 = vunpack.c.l.b16 %v15
  %v71 = vunpack.c.l.b16 %v16
  %v72 = vunpack.c.l.b16 %v17
  %v73 = vunpack.c.l.b16 %v18
  %v74 = vunpack.c.l.b16 %v19
  %v75 = vunpack.c.l.b16 %v20
  %v76 = vunpack.c.l.b16 %v21
  %v77 = vunpack.c.l.b16 %v22
  %v78 = vunpack.c.l.b16 %v23
  %v79 = vunpack.c.l.b16 %v24
  %v80 = vunpack.c.l.b16 %v25
  %v81 = vunpack.c.l.b16 %v26
  %v82 = vunpack.c.l.b16 %v27
  %v83 = vunpack.c.l.b16 %v28
  %v84 = vunpack.c.l.b16 %v29
  %v85 = vunpack.c.l.b16 %v30
  %v86 = vpack.c.b16 %v71, %v70
  %v87 = vpack.c.b16 %v73, %v72
  %v88 = vpack.c.b16 %v75, %v74
  %v89 = vpack.c.b16 %v77, %v76
  %v90 = vpack.c.b16 %v79, %v78
  %v91 = vpack.c.b16 %v81, %v80
  %v92 = vpack.c.b16 %v83, %v82
  %v93 = vpack.c.b16 %v85, %v84
  %v118 = vunpack.c.l.b16 %v31
  %v119 = vunpack.c.l.b16 %v32
  %v120 = vunpack.c.l.b16 %v33
  %v121 = vunpack.c.l.b16 %v34
  %v122 = vunpack.c.l.b16 %v35
  %v123 = vunpack.c.l.b16 %v36
  %v124 = vunpack.c.l.b16 %v37
  %v125 = vunpack.c.l.b16 %v38
  %v126 = vunpack.c.l.b16 %v39
  %v127 = vunpack.c.l.b16 %v40
  %v128 = vunpack.c.l.b16 %v41
  %v129 = vunpack.c.l.b16 %v42
  %v130 = vunpack.c.l.b16 %v43
  %v131 = vunpack.c.l.b16 %v44
  %v132 = vunpack.c.l.b16 %v45
  %v133 = vunpack.c.l.b16 %v46
  %v134 = vpack.c.b16 %v119, %v118
  %v135 = vpack.c.b16 %v121, %v120
  %v136 = vpack.c.b16 %v123, %v122
  %v137 = vpack.c.b16 %v125, %v124
  %v138 = vpack.c.b16 %v127, %v126
  %v139 = vpack.c.b16 %v129, %v128
  %v140 = vpack.c.b16 %v131, %v130
  %v141 = vpack.c.b16 %v133, %v132
  %150 = vmatprep.subr.bf16.mxu0 0
  %151 = vmatpush1.bf16.msra.mxu0 %v134
  %152 = vmatprep.subr.bf16.mxu0 0
  %153 = vmatpush1.bf16.msra.mxu0 %v135
  %154 = vmatprep.subr.bf16.mxu0 0
  %155 = vmatpush1.bf16.msra.mxu0 %v136
  %156 = vmatprep.subr.bf16.mxu0 0
  %157 = vmatpush1.bf16.msra.mxu0 %v137
  %158 = vmatprep.subr.bf16.mxu0 0
  %159 = vmatpush1.bf16.msra.mxu0 %v138
  %160 = vmatprep.subr.bf16.mxu0 0
  %161 = vmatpush1.bf16.msra.mxu0 %v139
  %162 = vmatprep.subr.bf16.mxu0 0
  %163 = vmatpush1.bf16.msra.mxu0 %v140
  %164 = vmatprep.subr.bf16.mxu0 0
  %165 = vmatpush1.bf16.msra.mxu0 %v141
  %166 = vmatprep.subr.bf16.mxu0 0
  %167 = vmatpush1.bf16.msra.mxu0 0
  %168 = vmatprep.subr.bf16.mxu0 0
  %169 = vmatpush1.bf16.msra.mxu0 0
  %170 = vmatprep.subr.bf16.mxu0 0
  %171 = vmatpush1.bf16.msra.mxu0 0
  %172 = vmatprep.subr.bf16.mxu0 0
  %173 = vmatpush1.bf16.msra.mxu0 0
  %174 = vmatprep.subr.bf16.mxu0 0
  %175 = vmatpush1.bf16.msra.mxu0 0
  %176 = vmatprep.subr.bf16.mxu0 0
  %177 = vmatpush1.bf16.msra.mxu0 0
  %178 = vmatprep.subr.bf16.mxu0 0
  %179 = vmatpush1.bf16.msra.mxu0 0
  %180 = vmatprep.subr.bf16.mxu0 0
  %181 = vmatpush1.bf16.msra.mxu0 0
  %182 = vmatprep.mubr.bf16.mxu0 0
  %183 = vmatmul.mubr.bf16.gmra.mrb[0].mxu0 %v86
  %v184 = vpop.f32.mrb[0].mxu0
  %v185 = vadd.f32 %v52, %v184
  %v186 = vpop.f32.mrb[0].mxu0
  %v187 = vpop.f32.mrb[0].mxu0
  %v188 = vadd.f32 %v52, %v187
  %v189 = vpop.f32.mrb[0].mxu0
  %190 = vmatprep.mubr.bf16.mxu0 0
  %191 = vmatmul.mubr.bf16.gmra.mrb[0].mxu0 %v87
  %v192 = vpop.f32.mrb[0].mxu0
  %v193 = vadd.f32 %v52, %v192
  %v194 = vpop.f32.mrb[0].mxu0
  %v195 = vpop.f32.mrb[0].mxu0
  %v196 = vadd.f32 %v52, %v195
  %v197 = vpop.f32.mrb[0].mxu0
  %198 = vmatprep.mubr.bf16.mxu0 0
  %199 = vmatmul.mubr.bf16.gmra.mrb[0].mxu0 %v88
  %v200 = vpop.f32.mrb[0].mxu0
  %v201 = vadd.f32 %v52, %v200
  %v202 = vpop.f32.mrb[0].mxu0
  %v203 = vpop.f32.mrb[0].mxu0
  %v204 = vadd.f32 %v52, %v203
  %v205 = vpop.f32.mrb[0].mxu0
  %206 = vmatprep.mubr.bf16.mxu0 0
  %207 = vmatmul.mubr.bf16.gmra.mrb[0].mxu0 %v89
  %v208 = vpop.f32.mrb[0].mxu0
  %v209 = vadd.f32 %v52, %v208
  %v210 = vpop.f32.mrb[0].mxu0
  %v211 = vpop.f32.mrb[0].mxu0
  %v212 = vadd.f32 %v52, %v211
  %v213 = vpop.f32.mrb[0].mxu0
  %214 = vmatprep.mubr.bf16.mxu0 0
  %215 = vmatmul.mubr.bf16.gmra.mrb[0].mxu0 %v90
  %v216 = vpop.f32.mrb[0].mxu0
  %v217 = vadd.f32 %v52, %v216
  %v218 = vpop.f32.mrb[0].mxu0
  %v219 = vpop.f32.mrb[0].mxu0
  %v220 = vadd.f32 %v52, %v219
  %v221 = vpop.f32.mrb[0].mxu0
  %222 = vmatprep.mubr.bf16.mxu0 0
  %223 = vmatmul.mubr.bf16.gmra.mrb[0].mxu0 %v91
  %v224 = vpop.f32.mrb[0].mxu0
  %v225 = vadd.f32 %v52, %v224
  %v226 = vpop.f32.mrb[0].mxu0
  %v227 = vpop.f32.mrb[0].mxu0
  %v228 = vadd.f32 %v52, %v227
  %v229 = vpop.f32.mrb[0].mxu0
  %230 = vmatprep.mubr.bf16.mxu0 0
  %231 = vmatmul.mubr.bf16.gmra.mrb[0].mxu0 %v92
  %v232 = vpop.f32.mrb[0].mxu0
  %v233 = vadd.f32 %v52, %v232
  %v234 = vpop.f32.mrb[0].mxu0
  %v235 = vpop.f32.mrb[0].mxu0
  %v236 = vadd.f32 %v52, %v235
  %v237 = vpop.f32.mrb[0].mxu0
  %238 = vmatprep.mubr.bf16.mxu0 0
  %239 = vmatmul.mubr.bf16.gmra.mrb[0].mxu0 %v93
  %v240 = vpop.f32.mrb[0].mxu0
  %v241 = vadd.f32 %v52, %v240
  %v242 = vpop.f32.mrb[0].mxu0
  %v243 = vpop.f32.mrb[0].mxu0
  %v244 = vadd.f32 %v52, %v243
  %v245 = vpop.f32.mrb[0].mxu0
  %246 = vdwg.mxu0
  %v247 = vmax.f32 %v185, 0.0
  %v248 = vmax.f32 %v188, 0.0
  %v249 = vmax.f32 %v193, 0.0
  %v250 = vmax.f32 %v196, 0.0
  %v251 = vmax.f32 %v201, 0.0
  %v252 = vmax.f32 %v204, 0.0
  %v253 = vmax.f32 %v209, 0.0
  %v254 = vmax.f32 %v212, 0.0
  %v255 = vmax.f32 %v217, 0.0
  %v256 = vmax.f32 %v220, 0.0
  %v257 = vmax.f32 %v225, 0.0
  %v258 = vmax.f32 %v228, 0.0
  %v259 = vmax.f32 %v233, 0.0
  %v260 = vmax.f32 %v236, 0.0
  %v261 = vmax.f32 %v241, 0.0
  %v262 = vmax.f32 %v244, 0.0
  %v263 = vpack.c.bf16 %v248, %v247
  %v264 = vpack.c.bf16 %v250, %v249
  %v265 = vpack.c.bf16 %v252, %v251
  %v266 = vpack.c.bf16 %v254, %v253
  %v267 = vpack.c.bf16 %v256, %v255
  %v268 = vpack.c.bf16 %v258, %v257
  %v269 = vpack.c.bf16 %v260, %v259
  %v270 = vpack.c.bf16 %v262, %v261
  %v279 = vunpack.c.l.b16 %v263
  %v280 = vunpack.c.h.b16 %v263
  %v281 = vunpack.c.l.b16 %v264
  %v282 = vunpack.c.h.b16 %v264
  %v283 = vunpack.c.l.b16 %v265
  %v284 = vunpack.c.h.b16 %v265
  %v285 = vunpack.c.l.b16 %v266
  %v286 = vunpack.c.h.b16 %v266
  %v287 = vunpack.c.l.b16 %v267
  %v288 = vunpack.c.h.b16 %v267
  %v289 = vunpack.c.l.b16 %v268
  %v290 = vunpack.c.h.b16 %v268
  %v291 = vunpack.c.l.b16 %v269
  %v292 = vunpack.c.h.b16 %v269
  %v293 = vunpack.c.l.b16 %v270
  %v294 = vunpack.c.h.b16 %v270
  %v295 = vpack.c.b16 %v279, %v279
  %v296 = vpack.c.b16 %v280, %v280
  %v297 = vpack.c.b16 %v281, %v281
  %v298 = vpack.c.b16 %v282, %v282
  %v299 = vpack.c.b16 %v283, %v283
  %v300 = vpack.c.b16 %v284, %v284
  %v301 = vpack.c.b16 %v285, %v285
  %v302 = vpack.c.b16 %v286, %v286
  %v303 = vpack.c.b16 %v287, %v287
  %v304 = vpack.c.b16 %v288, %v288
  %v305 = vpack.c.b16 %v289, %v289
  %v306 = vpack.c.b16 %v290, %v290
  %v307 = vpack.c.b16 %v291, %v291
  %v308 = vpack.c.b16 %v292, %v292
  %v309 = vpack.c.b16 %v293, %v293
  %v310 = vpack.c.b16 %v294, %v294
  %327 = vst [vmem:[%s3] sm:$0xf] %v295
  %328 = vst [vmem:[%s3 + $0x4] sm:$0xf] %v296
  %329 = vst [vmem:[%s3 + $0x8] sm:$0xf] %v297
  %330 = vst [vmem:[%s3 + $0xc] sm:$0xf] %v298
  %331 = vst [vmem:[%s3 + $0x10] sm:$0xf] %v299
  %332 = vst [vmem:[%s3 + $0x14] sm:$0xf] %v300
  %333 = vst [vmem:[%s3 + $0x18] sm:$0xf] %v301
  %334 = vst [vmem:[%s3 + $0x1c] sm:$0xf] %v302
  %335 = vst [vmem:[%s3 + $0x20] sm:$0xf] %v303
  %336 = vst [vmem:[%s3 + $0x24] sm:$0xf] %v304
  %337 = vst [vmem:[%s3 + $0x28] sm:$0xf] %v305
  %338 = vst [vmem:[%s3 + $0x2c] sm:$0xf] %v306
  %339 = vst [vmem:[%s3 + $0x30] sm:$0xf] %v307
  %340 = vst [vmem:[%s3 + $0x34] sm:$0xf] %v308
  %341 = vst [vmem:[%s3 + $0x38] sm:$0xf] %v309
  %342 = vst [vmem:[%s3 + $0x3c] sm:$0xf] %v310
  // Predicated region
  $region14: #{basic_block_forward.2} parent=0 // pred_check
    _
  $region15: #{basic_block_forward.2} parent=0 // pred_check_branch
    %344 = sbr.rel (0) target = $region17
  $region16: #{basic_block_forward.2} parent=0 // pred_region
    _
  $region17: #{basic_block_forward.2} parent=0 // pred_fallthru
    _
  // Predicated region
  $region18: #{basic_block_forward.2} parent=0 // pred_check
    _
  $region19: #{basic_block_forward.2} parent=0 // pred_check_branch
    %346 = sbr.rel (0) target = $region21
  $region20: #{basic_block_forward.2} parent=0 // pred_region
    _
  $region21: #{basic_block_forward.2} parent=0 // pred_fallthru
    _

// kernel: basic_block_forward.3
$region0: #{basic_block_forward.3}
  #allocation0 [shape = 'u32[]', space=smem, size = 0x4, offset = 0x4, fixed_abs, tag = 'smem constant byte address 0x4 - core index']
  #allocation1 [shape = 'u32[144,128]{1,0:T(1,128)}', space=vmem, size = 0x12000, scoped, tag = 'internal scratch']
  %s0 = inlined_call_operand.vmem [shape: bf16[128,128], index: 0, kind: input, shape index: {}]
  %s1 = inlined_call_operand.vmem [shape: bf16[128,128], index: 1, kind: input, shape index: {}]
  %s2 = inlined_call_operand.vmem [shape: f32[1,128], index: 2, kind: input, shape index: {}]
  %s3 = inlined_call_operand.vmem [shape: f32[128,128], index: 3, kind: input, shape index: {}]
  %s4 = inlined_call_operand.vmem [shape: f32[128,128], index: 4, kind: output, shape index: {}]
  %s5 = sld [smem:[#allocation0]]
  $region26: #{basic_block_forward.3} parent=0
    _
  %s7 = ssub.s32 1, %s5
  %s8 = scalar_select 0, %s7, %s5
  // Predicated region
  $region2: #{basic_block_forward.3} parent=0 // pred_check
    _
  $region3: #{basic_block_forward.3} parent=0 // pred_check_branch
    %10 = sbr.rel (0) target = $region5
  $region4: #{basic_block_forward.3} parent=0 // pred_region
    _
  $region5: #{basic_block_forward.3} parent=0 // pred_fallthru
    _
  // Predicated region
  $region6: #{basic_block_forward.3} parent=0 // pred_check
    _
  $region7: #{basic_block_forward.3} parent=0 // pred_check_branch
    %12 = sbr.rel (0) target = $region9
  $region8: #{basic_block_forward.3} parent=0 // pred_region
    _
  $region9: #{basic_block_forward.3} parent=0 // pred_fallthru
    _
  // Predicated region
  $region10: #{basic_block_forward.3} parent=0 // pred_check
    _
  $region11: #{basic_block_forward.3} parent=0 // pred_check_branch
    %14 = sbr.rel (0) target = $region13
  $region12: #{basic_block_forward.3} parent=0 // pred_region
    _
  $region13: #{basic_block_forward.3} parent=0 // pred_fallthru
    _
  // Predicated region
  $region14: #{basic_block_forward.3} parent=0 // pred_check
    _
  $region15: #{basic_block_forward.3} parent=0 // pred_check_branch
    %16 = sbr.rel (0) target = $region17
  $region16: #{basic_block_forward.3} parent=0 // pred_region
    _
  $region17: #{basic_block_forward.3} parent=0 // pred_fallthru
    _
  %v18 = vld [vmem:[%s0] sm:$0xf]
  %v19 = vld [vmem:[%s0 + $0x4] sm:$0xf]
  %v20 = vld [vmem:[%s0 + $0x8] sm:$0xf]
  %v21 = vld [vmem:[%s0 + $0xc] sm:$0xf]
  %v22 = vld [vmem:[%s0 + $0x10] sm:$0xf]
  %v23 = vld [vmem:[%s0 + $0x14] sm:$0xf]
  %v24 = vld [vmem:[%s0 + $0x18] sm:$0xf]
  %v25 = vld [vmem:[%s0 + $0x1c] sm:$0xf]
  %v26 = vld [vmem:[%s0 + $0x20] sm:$0xf]
  %v27 = vld [vmem:[%s0 + $0x24] sm:$0xf]
  %v28 = vld [vmem:[%s0 + $0x28] sm:$0xf]
  %v29 = vld [vmem:[%s0 + $0x2c] sm:$0xf]
  %v30 = vld [vmem:[%s0 + $0x30] sm:$0xf]
  %v31 = vld [vmem:[%s0 + $0x34] sm:$0xf]
  %v32 = vld [vmem:[%s0 + $0x38] sm:$0xf]
  %v33 = vld [vmem:[%s0 + $0x3c] sm:$0xf]
  %v34 = vld [vmem:[%s1] sm:$0xf]
  %v35 = vld [vmem:[%s1 + $0x4] sm:$0xf]
  %v36 = vld [vmem:[%s1 + $0x8] sm:$0xf]
  %v37 = vld [vmem:[%s1 + $0xc] sm:$0xf]
  %v38 = vld [vmem:[%s1 + $0x10] sm:$0xf]
  %v39 = vld [vmem:[%s1 + $0x14] sm:$0xf]
  %v40 = vld [vmem:[%s1 + $0x18] sm:$0xf]
  %v41 = vld [vmem:[%s1 + $0x1c] sm:$0xf]
  %v42 = vld [vmem:[%s1 + $0x20] sm:$0xf]
  %v43 = vld [vmem:[%s1 + $0x24] sm:$0xf]
  %v44 = vld [vmem:[%s1 + $0x28] sm:$0xf]
  %v45 = vld [vmem:[%s1 + $0x2c] sm:$0xf]
  %v46 = vld [vmem:[%s1 + $0x30] sm:$0xf]
  %v47 = vld [vmem:[%s1 + $0x34] sm:$0xf]
  %v48 = vld [vmem:[%s1 + $0x38] sm:$0xf]
  %v49 = vld [vmem:[%s1 + $0x3c] sm:$0xf]
  %v50 = vld [vmem:[%s2] sm:$0x1]
  %v52 = vlaneseq
  %v53 = vshrl.u32 %v52, 7
  %v54 = vsub.s32 0, %v53
  %v55 = vrot.slane %v50, %v54
  %v73 = vunpack.c.l.b16 %v18
  %v74 = vunpack.c.l.b16 %v19
  %v75 = vunpack.c.l.b16 %v20
  %v76 = vunpack.c.l.b16 %v21
  %v77 = vunpack.c.l.b16 %v22
  %v78 = vunpack.c.l.b16 %v23
  %v79 = vunpack.c.l.b16 %v24
  %v80 = vunpack.c.l.b16 %v25
  %v81 = vunpack.c.l.b16 %v26
  %v82 = vunpack.c.l.b16 %v27
  %v83 = vunpack.c.l.b16 %v28
  %v84 = vunpack.c.l.b16 %v29
  %v85 = vunpack.c.l.b16 %v30
  %v86 = vunpack.c.l.b16 %v31
  %v87 = vunpack.c.l.b16 %v32
  %v88 = vunpack.c.l.b16 %v33
  %v89 = vpack.c.b16 %v74, %v73
  %v90 = vpack.c.b16 %v76, %v75
  %v91 = vpack.c.b16 %v78, %v77
  %v92 = vpack.c.b16 %v80, %v79
  %v93 = vpack.c.b16 %v82, %v81
  %v94 = vpack.c.b16 %v84, %v83
  %v95 = vpack.c.b16 %v86, %v85
  %v96 = vpack.c.b16 %v88, %v87
  %v121 = vunpack.c.l.b16 %v34
  %v122 = vunpack.c.l.b16 %v35
  %v123 = vunpack.c.l.b16 %v36
  %v124 = vunpack.c.l.b16 %v37
  %v125 = vunpack.c.l.b16 %v38
  %v126 = vunpack.c.l.b16 %v39
  %v127 = vunpack.c.l.b16 %v40
  %v128 = vunpack.c.l.b16 %v41
  %v129 = vunpack.c.l.b16 %v42
  %v130 = vunpack.c.l.b16 %v43
  %v131 = vunpack.c.l.b16 %v44
  %v132 = vunpack.c.l.b16 %v45
  %v133 = vunpack.c.l.b16 %v46
  %v134 = vunpack.c.l.b16 %v47
  %v135 = vunpack.c.l.b16 %v48
  %v136 = vunpack.c.l.b16 %v49
  %v137 = vpack.c.b16 %v122, %v121
  %v138 = vpack.c.b16 %v124, %v123
  %v139 = vpack.c.b16 %v126, %v125
  %v140 = vpack.c.b16 %v128, %v127
  %v141 = vpack.c.b16 %v130, %v129
  %v142 = vpack.c.b16 %v132, %v131
  %v143 = vpack.c.b16 %v134, %v133
  %v144 = vpack.c.b16 %v136, %v135
  %153 = vmatprep.subr.bf16.mxu0 0
  %154 = vmatpush1.bf16.msra.mxu0 %v137
  %155 = vmatprep.subr.bf16.mxu0 0
  %156 = vmatpush1.bf16.msra.mxu0 %v138
  %157 = vmatprep.subr.bf16.mxu0 0
  %158 = vmatpush1.bf16.msra.mxu0 %v139
  %159 = vmatprep.subr.bf16.mxu0 0
  %160 = vmatpush1.bf16.msra.mxu0 %v140
  %161 = vmatprep.subr.bf16.mxu0 0
  %162 = vmatpush1.bf16.msra.mxu0 %v141
  %163 = vmatprep.subr.bf16.mxu0 0
  %164 = vmatpush1.bf16.msra.mxu0 %v142
  %165 = vmatprep.subr.bf16.mxu0 0
  %166 = vmatpush1.bf16.msra.mxu0 %v143
  %167 = vmatprep.subr.bf16.mxu0 0
  %168 = vmatpush1.bf16.msra.mxu0 %v144
  %169 = vmatprep.subr.bf16.mxu0 0
  %170 = vmatpush1.bf16.msra.mxu0 0
  %171 = vmatprep.subr.bf16.mxu0 0
  %172 = vmatpush1.bf16.msra.mxu0 0
  %173 = vmatprep.subr.bf16.mxu0 0
  %174 = vmatpush1.bf16.msra.mxu0 0
  %175 = vmatprep.subr.bf16.mxu0 0
  %176 = vmatpush1.bf16.msra.mxu0 0
  %177 = vmatprep.subr.bf16.mxu0 0
  %178 = vmatpush1.bf16.msra.mxu0 0
  %179 = vmatprep.subr.bf16.mxu0 0
  %180 = vmatpush1.bf16.msra.mxu0 0
  %181 = vmatprep.subr.bf16.mxu0 0
  %182 = vmatpush1.bf16.msra.mxu0 0
  %183 = vmatprep.subr.bf16.mxu0 0
  %184 = vmatpush1.bf16.msra.mxu0 0
  %185 = vmatprep.mubr.bf16.mxu0 0
  %186 = vmatmul.mubr.bf16.gmra.mrb[0].mxu0 %v89
  %v187 = vpop.f32.mrb[0].mxu0
  %v188 = vadd.f32 %v55, %v187
  %v189 = vpop.f32.mrb[0].mxu0
  %v190 = vpop.f32.mrb[0].mxu0
  %v191 = vadd.f32 %v55, %v190
  %v192 = vpop.f32.mrb[0].mxu0
  %193 = vmatprep.mubr.bf16.mxu0 0
  %194 = vmatmul.mubr.bf16.gmra.mrb[0].mxu0 %v90
  %v195 = vpop.f32.mrb[0].mxu0
  %v196 = vadd.f32 %v55, %v195
  %v197 = vpop.f32.mrb[0].mxu0
  %v198 = vpop.f32.mrb[0].mxu0
  %v199 = vadd.f32 %v55, %v198
  %v200 = vpop.f32.mrb[0].mxu0
  %201 = vmatprep.mubr.bf16.mxu0 0
  %202 = vmatmul.mubr.bf16.gmra.mrb[0].mxu0 %v91
  %v203 = vpop.f32.mrb[0].mxu0
  %v204 = vadd.f32 %v55, %v203
  %v205 = vpop.f32.mrb[0].mxu0
  %v206 = vpop.f32.mrb[0].mxu0
  %v207 = vadd.f32 %v55, %v206
  %v208 = vpop.f32.mrb[0].mxu0
  %209 = vmatprep.mubr.bf16.mxu0 0
  %210 = vmatmul.mubr.bf16.gmra.mrb[0].mxu0 %v92
  %v211 = vpop.f32.mrb[0].mxu0
  %v212 = vadd.f32 %v55, %v211
  %v213 = vpop.f32.mrb[0].mxu0
  %v214 = vpop.f32.mrb[0].mxu0
  %v215 = vadd.f32 %v55, %v214
  %v216 = vpop.f32.mrb[0].mxu0
  %217 = vmatprep.mubr.bf16.mxu0 0
  %218 = vmatmul.mubr.bf16.gmra.mrb[0].mxu0 %v93
  %v219 = vpop.f32.mrb[0].mxu0
  %v220 = vadd.f32 %v55, %v219
  %v221 = vpop.f32.mrb[0].mxu0
  %v222 = vpop.f32.mrb[0].mxu0
  %v223 = vadd.f32 %v55, %v222
  %v224 = vpop.f32.mrb[0].mxu0
  %225 = vmatprep.mubr.bf16.mxu0 0
  %226 = vmatmul.mubr.bf16.gmra.mrb[0].mxu0 %v94
  %v227 = vpop.f32.mrb[0].mxu0
  %v228 = vadd.f32 %v55, %v227
  %v229 = vpop.f32.mrb[0].mxu0
  %v230 = vpop.f32.mrb[0].mxu0
  %v231 = vadd.f32 %v55, %v230
  %v232 = vpop.f32.mrb[0].mxu0
  %233 = vmatprep.mubr.bf16.mxu0 0
  %234 = vmatmul.mubr.bf16.gmra.mrb[0].mxu0 %v95
  %v235 = vpop.f32.mrb[0].mxu0
  %v236 = vadd.f32 %v55, %v235
  %v237 = vpop.f32.mrb[0].mxu0
  %v238 = vpop.f32.mrb[0].mxu0
  %v239 = vadd.f32 %v55, %v238
  %v240 = vpop.f32.mrb[0].mxu0
  %241 = vmatprep.mubr.bf16.mxu0 0
  %242 = vmatmul.mubr.bf16.gmra.mrb[0].mxu0 %v96
  %v243 = vpop.f32.mrb[0].mxu0
  %v244 = vadd.f32 %v55, %v243
  %v245 = vpop.f32.mrb[0].mxu0
  %v246 = vpop.f32.mrb[0].mxu0
  %v247 = vadd.f32 %v55, %v246
  %v248 = vpop.f32.mrb[0].mxu0
  %249 = vdwg.mxu0
  %v250 = vld [vmem:[%s3] sm:$0xff]
  %v251 = vld [vmem:[%s3 + $0x8] sm:$0xff]
  %v252 = vld [vmem:[%s3 + $0x10] sm:$0xff]
  %v253 = vld [vmem:[%s3 + $0x18] sm:$0xff]
  %v254 = vld [vmem:[%s3 + $0x20] sm:$0xff]
  %v255 = vld [vmem:[%s3 + $0x28] sm:$0xff]
  %v256 = vld [vmem:[%s3 + $0x30] sm:$0xff]
  %v257 = vld [vmem:[%s3 + $0x38] sm:$0xff]
  %v258 = vld [vmem:[%s3 + $0x40] sm:$0xff]
  %v259 = vld [vmem:[%s3 + $0x48] sm:$0xff]
  %v260 = vld [vmem:[%s3 + $0x50] sm:$0xff]
  %v261 = vld [vmem:[%s3 + $0x58] sm:$0xff]
  %v262 = vld [vmem:[%s3 + $0x60] sm:$0xff]
  %v263 = vld [vmem:[%s3 + $0x68] sm:$0xff]
  %v264 = vld [vmem:[%s3 + $0x70] sm:$0xff]
  %v265 = vld [vmem:[%s3 + $0x78] sm:$0xff]
  %v266 = vadd.f32 %v188, %v250
  %v267 = vadd.f32 %v191, %v251
  %v268 = vadd.f32 %v196, %v252
  %v269 = vadd.f32 %v199, %v253
  %v270 = vadd.f32 %v204, %v254
  %v271 = vadd.f32 %v207, %v255
  %v272 = vadd.f32 %v212, %v256
  %v273 = vadd.f32 %v215, %v257
  %v274 = vadd.f32 %v220, %v258
  %v275 = vadd.f32 %v223, %v259
  %v276 = vadd.f32 %v228, %v260
  %v277 = vadd.f32 %v231, %v261
  %v278 = vadd.f32 %v236, %v262
  %v279 = vadd.f32 %v239, %v263
  %v280 = vadd.f32 %v244, %v264
  %v281 = vadd.f32 %v247, %v265
  %v282 = vmax.f32 %v266, 0.0
  %v283 = vmax.f32 %v267, 0.0
  %v284 = vmax.f32 %v268, 0.0
  %v285 = vmax.f32 %v269, 0.0
  %v286 = vmax.f32 %v270, 0.0
  %v287 = vmax.f32 %v271, 0.0
  %v288 = vmax.f32 %v272, 0.0
  %v289 = vmax.f32 %v273, 0.0
  %v290 = vmax.f32 %v274, 0.0
  %v291 = vmax.f32 %v275, 0.0
  %v292 = vmax.f32 %v276, 0.0
  %v293 = vmax.f32 %v277, 0.0
  %v294 = vmax.f32 %v278, 0.0
  %v295 = vmax.f32 %v279, 0.0
  %v296 = vmax.f32 %v280, 0.0
  %v297 = vmax.f32 %v281, 0.0
  %298 = vst [vmem:[%s4] sm:$0xff] %v282
  %299 = vst [vmem:[%s4 + $0x8] sm:$0xff] %v283
  %300 = vst [vmem:[%s4 + $0x10] sm:$0xff] %v284
  %301 = vst [vmem:[%s4 + $0x18] sm:$0xff] %v285
  %302 = vst [vmem:[%s4 + $0x20] sm:$0xff] %v286
  %303 = vst [vmem:[%s4 + $0x28] sm:$0xff] %v287
  %304 = vst [vmem:[%s4 + $0x30] sm:$0xff] %v288
  %305 = vst [vmem:[%s4 + $0x38] sm:$0xff] %v289
  %306 = vst [vmem:[%s4 + $0x40] sm:$0xff] %v290
  %307 = vst [vmem:[%s4 + $0x48] sm:$0xff] %v291
  %308 = vst [vmem:[%s4 + $0x50] sm:$0xff] %v292
  %309 = vst [vmem:[%s4 + $0x58] sm:$0xff] %v293
  %310 = vst [vmem:[%s4 + $0x60] sm:$0xff] %v294
  %311 = vst [vmem:[%s4 + $0x68] sm:$0xff] %v295
  %312 = vst [vmem:[%s4 + $0x70] sm:$0xff] %v296
  %313 = vst [vmem:[%s4 + $0x78] sm:$0xff] %v297
  // Predicated region
  $region18: #{basic_block_forward.3} parent=0 // pred_check
    _
  $region19: #{basic_block_forward.3} parent=0 // pred_check_branch
    %315 = sbr.rel (0) target = $region21
  $region20: #{basic_block_forward.3} parent=0 // pred_region
    _
  $region21: #{basic_block_forward.3} parent=0 // pred_fallthru
    _
  // Predicated region
  $region22: #{basic_block_forward.3} parent=0 // pred_check
    _
  $region23: #{basic_block_forward.3} parent=0 // pred_check_branch
    %317 = sbr.rel (0) target = $region25
  $region24: #{basic_block_forward.3} parent=0 // pred_region
    _
  $region25: #{basic_block_forward.3} parent=0 // pred_fallthru
    _

</llo_original>
